<compile_context>
chip_gen: v6e
topology: v6e:2x2x1
jax: 0.10.0
libtpu: 0.0.40
codegen_flags: <defaults>
</compile_context>

<pallas_src>
import functools

import jax
import jax.numpy as jnp
from jax.experimental import pallas as pl
from jax.experimental.pallas import tpu as pltpu

LANE = 128
SUBLANE = 8


def _round_up(n, m):
    return ((n + m - 1) // m) * m


def _softplus(x):
    # Matches torch.nn.Softplus(beta=1, threshold=20): linear above threshold.
    # exp/log1p both hit the EUP slot -> free filler under a mem-bound roofline.
    return jnp.where(x > 20.0, x, jnp.log1p(jnp.exp(jnp.minimum(x, 20.0))))


def _encoder_kernel(n_hidden_layers, z_dim, x_ref, *refs):
    """Fused MLP encoder kernel.

    refs layout:
      [W0, b0, ..., W_{L-1}, b_{L-1},   # hidden layers (softplus), lane-padded
       W_head, b_head,                  # fused [mean | log_var] head (2*z_dim)
       out_ref]                         # (tile_b, 2*z_dim) output slab
    Output slab columns: [0, z_dim) = z_loc, [z_dim, 2*z_dim) = z_scale.
    """
    out_ref = refs[-1]
    wrefs = refs[:-1]

    # x may arrive as bf16 (halved HBM stream); compute stays f32 everywhere.
    h = x_ref[...].astype(jnp.float32)

    # Hidden layers: Linear + Softplus
    for i in range(n_hidden_layers):
        w = wrefs[2 * i][...]
        b = wrefs[2 * i + 1][...]
        h = _softplus(jnp.dot(h, w, preferred_element_type=jnp.float32) + b)

    # Fused [mean | log_var] head: one MXU pass instead of two.
    w_h = wrefs[2 * n_hidden_layers][...]
    b_h = wrefs[2 * n_hidden_layers + 1][...]
    head = jnp.dot(h, w_h, preferred_element_type=jnp.float32) + b_h

    # exp only on the log_var lanes (lane >= z_dim); z_loc lanes pass through.
    lane = jax.lax.broadcasted_iota(jnp.int32, head.shape, dimension=1)
    out_ref[...] = jnp.where(lane >= z_dim, jnp.exp(head), head).astype(out_ref.dtype)


def prepare_encoder_params(params, z_dim):
    """One-time parameter prep (call at init, NOT per forward step).

    params: [(W0, b0), ..., (W_mean, b_mean), (W_logvar, b_logvar)] with
            W_i of shape (in, out), b_i of shape (1, out).

    Fuses the mean/log_var heads into one (hidden, 2*z_dim) linear and
    zero-pads hidden output dims up to 128 lanes.  The input dim of the first
    layer is NOT padded (x is streamed unpadded), and the head output is kept
    at exactly 2*z_dim (lane-dense enough; 4x less output traffic than a
    128-lane slab).  Zero padding is numerically inert: padded hidden lanes
    produce softplus(0) activations that always multiply zero weight rows in
    the next layer.
    """
    n_hidden = len(params) - 2
    (w_m, b_m), (w_v, b_v) = params[n_hidden], params[n_hidden + 1]
    w_head = jnp.concatenate([w_m, w_v], axis=1)      # (hidden, 2*z_dim)
    b_head = jnp.concatenate([b_m, b_v], axis=1)      # (1, 2*z_dim)
    packed = list(params[:n_hidden]) + [(w_head, b_head)]

    flat = []
    prev_pad = packed[0][0].shape[0]                  # first-layer K = d_in, unpadded
    for li, (w, b) in enumerate(packed):
        fi, fo = w.shape
        is_head = li == len(packed) - 1
        fo_p = fo if is_head else _round_up(fo, LANE)
        fi_p = prev_pad
        w_p = jnp.zeros((fi_p, fo_p), jnp.float32).at[:fi, :fo].set(
            w.astype(jnp.float32))
        b_p = jnp.zeros((1, fo_p), jnp.float32).at[:, :fo].set(
            b.astype(jnp.float32))
        flat.extend([w_p, b_p])
        prev_pad = fo_p
    return flat


def encoder_forward(x, prepped_params, z_dim, *, block_batch=1024):
    """Run the fused encoder Pallas kernel.

    x:              (B, layers[0]) float32 or bfloat16
    prepped_params: output of prepare_encoder_params()
    Returns (z_loc, z_scale), each (B, z_dim) float32.
    """
    B, d_in = x.shape
    n_hidden = len(prepped_params) // 2 - 1
    assert prepped_params[0].shape[0] == d_in, "x feature dim mismatch"
    out_cols = prepped_params[-2].shape[1]            # 2 * z_dim
    assert out_cols == 2 * z_dim

    # Batch tile: as large as requested, clamped to B, always a multiple of 8.
    tile_b = _round_up(max(1, min(block_batch, B)), SUBLANE)
    grid = (pl.cdiv(B, tile_b),)

    # x tiled over batch (unpadded feature dim == full array dim: legal).
    # Weights/biases are whole-array VMEM residents (constant across the grid).
    in_specs = [pl.BlockSpec((tile_b, d_in), lambda i: (i, 0))]
    for _ in prepped_params:
        in_specs.append(pl.BlockSpec(memory_space=pltpu.MemorySpace.VMEM))

    out_specs = pl.BlockSpec((tile_b, out_cols), lambda i: (i, 0))
    out_shape = jax.ShapeDtypeStruct((B, out_cols), jnp.float32)

    # ---- advisory cost estimate -------------------------------------------
    dims_p = [prepped_params[2 * i].shape[1] for i in range(n_hidden + 1)]
    flops = 0
    prev = d_in
    for d in dims_p:
        flops += 2 * B * prev * d
        prev = d
    transcendentals = B * (2 * sum(dims_p[:-1]) + z_dim)   # softplus + exp
    bytes_accessed = (x.size * x.dtype.itemsize
                      + sum(p.size * 4 for p in prepped_params)
                      + B * out_cols * 4)

    kernel = functools.partial(_encoder_kernel, n_hidden, z_dim)

    slab = pl.pallas_call(
        kernel,
        out_shape=out_shape,
        grid_spec=pltpu.PrefetchScalarGridSpec(
            num_scalar_prefetch=0,
            grid=grid,
            in_specs=in_specs,
            out_specs=out_specs,
        ),
        compiler_params=pltpu.CompilerParams(
            dimension_semantics=("parallel",),
        ),
        cost_estimate=pl.CostEstimate(
            flops=flops,
            transcendentals=transcendentals,
            bytes_accessed=bytes_accessed,
        ),
    )(x, *prepped_params)

    # Cheap contiguous slices; XLA fuses these into consumers.
    z_loc = slab[:, :z_dim]
    z_scale = slab[:, z_dim:]
    return z_loc, z_scale


def init_encoder_params(key, layers, z_dim):
    """Deterministic init matching nn.Linear default (uniform +-1/sqrt(fan_in)).

    Weights stored as (in, out); biases as (1, out).
    """
    params = []
    dims = list(layers)
    fan_pairs = [(dims[i], dims[i + 1]) for i in range(len(dims) - 1)]
    fan_pairs += [(dims[-1], z_dim), (dims[-1], z_dim)]
    for (fan_in, fan_out) in fan_pairs:
        key, kw, kb = jax.random.split(key, 3)
        bound = 1.0 / jnp.sqrt(jnp.float32(fan_in))
        w = jax.random.uniform(kw, (fan_in, fan_out), jnp.float32, -bound, bound)
        b = jax.random.uniform(kb, (1, fan_out), jnp.float32, -bound, bound)
        params.append((w, b))
    return params


def encoder_reference(x, params):
    """Pure-JAX reference for correctness checking."""
    n_hidden = len(params) - 2
    out = x.astype(jnp.float32)
    for i in range(n_hidden):
        w, b = params[i]
        out = _softplus(out @ w + b)
    w_m, b_m = params[n_hidden]
    w_v, b_v = params[n_hidden + 1]
    return out @ w_m + b_m, jnp.exp(out @ w_v + b_v)


if __name__ == "__main__":
    # Small shapes consistent with the module: layers=[32, 64, 64], z_dim=16.
    layers = [32, 64, 64]
    z_dim = 16

    key = jax.random.PRNGKey(0)
    params = init_encoder_params(key, layers, z_dim)
    prepped = prepare_encoder_params(params, z_dim)          # one-time prep

    # ---- Case 1: batch evenly divisible by the tile ------------------------
    x1 = jax.random.normal(jax.random.fold_in(key, 1), (64, layers[0]), jnp.float32)
    z_loc1, z_scale1 = encoder_forward(x1, prepped, z_dim, block_batch=32)
    jax.block_until_ready((z_loc1, z_scale1))
    r_loc1, r_scale1 = encoder_reference(x1, params)
    assert z_loc1.shape == (64, z_dim) and z_scale1.shape == (64, z_dim)
    assert jnp.allclose(z_loc1, r_loc1, atol=1e-5, rtol=1e-4)
    assert jnp.allclose(z_scale1, r_scale1, atol=1e-5, rtol=1e-4)
    assert bool(jnp.all(z_scale1 > 0))

    # ---- Case 2: ragged batch (cdiv grid, partial last tile) and a
    #      block_batch that is not a multiple of 8 (rounded up to 32) ---------
    x2 = jax.random.normal(jax.random.fold_in(key, 2), (100, layers[0]), jnp.float32)
    z_loc2, z_scale2 = encoder_forward(x2, prepped, z_dim, block_batch=30)
    jax.block_until_ready((z_loc2, z_scale2))
    r_loc2, r_scale2 = encoder_reference(x2, params)
    assert z_loc2.shape == (100, z_dim) and z_scale2.shape == (100, z_dim)
    assert jnp.allclose(z_loc2, r_loc2, atol=1e-5, rtol=1e-4)
    assert jnp.allclose(z_scale2, r_scale2, atol=1e-5, rtol=1e-4)

    # ---- Case 3: bf16 input streaming (halved HBM read); reference fed the
    #      same bf16-rounded values so the f32 in-kernel math matches tightly -
    x3 = x1.astype(jnp.bfloat16)
    z_loc3, z_scale3 = encoder_forward(x3, prepped, z_dim, block_batch=32)
    jax.block_until_ready((z_loc3, z_scale3))
    r_loc3, r_scale3 = encoder_reference(x3.astype(jnp.float32), params)
    assert jnp.allclose(z_loc3, r_loc3, atol=1e-5, rtol=1e-4)
    assert jnp.allclose(z_scale3, r_scale3, atol=1e-5, rtol=1e-4)

    print("KERNEL_OK")
</pallas_src>

<mosaic_0001>
module attributes {stable_mosaic.version = 11 : i64} {
  func.func @_encoder_kernel(%arg0: i32, %arg1: memref<32x32xf32, #tpu.memory_space<vmem>>, %arg2: memref<32x128xf32, #tpu.memory_space<vmem>>, %arg3: memref<1x128xf32, #tpu.memory_space<vmem>>, %arg4: memref<128x128xf32, #tpu.memory_space<vmem>>, %arg5: memref<1x128xf32, #tpu.memory_space<vmem>>, %arg6: memref<128x32xf32, #tpu.memory_space<vmem>>, %arg7: memref<1x32xf32, #tpu.memory_space<vmem>>, %arg8: memref<32x32xf32, #tpu.memory_space<vmem>>) attributes {dimension_semantics = [#tpu.dimension_semantics<parallel>], iteration_bounds = array<i64: 2>, scalar_prefetch = 0 : i64, scratch_operands = 0 : i64, tpu.core_type = #tpu.core_type<tc>, window_params = [{transform_indices = @transform_0, window_bounds = array<i64: 32, 32>}, {pipeline_mode = #tpu.pipeline_mode<synchronous>, transform_indices = @transform_1, window_bounds = array<i64: 32, 128>}, {pipeline_mode = #tpu.pipeline_mode<synchronous>, transform_indices = @transform_2, window_bounds = array<i64: 1, 128>}, {pipeline_mode = #tpu.pipeline_mode<synchronous>, transform_indices = @transform_3, window_bounds = array<i64: 128, 128>}, {pipeline_mode = #tpu.pipeline_mode<synchronous>, transform_indices = @transform_4, window_bounds = array<i64: 1, 128>}, {pipeline_mode = #tpu.pipeline_mode<synchronous>, transform_indices = @transform_5, window_bounds = array<i64: 128, 32>}, {pipeline_mode = #tpu.pipeline_mode<synchronous>, transform_indices = @transform_6, window_bounds = array<i64: 1, 32>}, {transform_indices = @transform_7, window_bounds = array<i64: 32, 32>}]} {
    %c0 = arith.constant 0 : index
    %c0_0 = arith.constant 0 : index
    %0 = vector.load %arg1[%c0, %c0_0] : memref<32x32xf32, #tpu.memory_space<vmem>>, vector<32x32xf32>
    %c0_1 = arith.constant 0 : index
    %c0_2 = arith.constant 0 : index
    %1 = vector.load %arg2[%c0_1, %c0_2] : memref<32x128xf32, #tpu.memory_space<vmem>>, vector<32x128xf32>
    %c0_3 = arith.constant 0 : index
    %c0_4 = arith.constant 0 : index
    %2 = vector.load %arg3[%c0_3, %c0_4] : memref<1x128xf32, #tpu.memory_space<vmem>>, vector<1x128xf32>
    %cst = arith.constant dense<0.000000e+00> : vector<32x128xf32>
    %3 = tpu.matmul %0, %1, %cst {dimension_numbers = #tpu.dot_dimension_numbers<[1], [0], [0], [1], [0, 0, 1, 1], [], []>} : vector<32x32xf32>, vector<32x128xf32>, vector<32x128xf32> -> vector<32x128xf32>
    %4 = vector.broadcast %2 : vector<1x128xf32> to vector<32x128xf32>
    %5 = arith.addf %3, %4 : vector<32x128xf32>
    %cst_5 = arith.constant 2.000000e+01 : f32
    %6 = vector.broadcast %cst_5 : f32 to vector<32x128xf32>
    %7 = arith.cmpf ogt, %5, %6 : vector<32x128xf32>
    %cst_6 = arith.constant 2.000000e+01 : f32
    %8 = vector.broadcast %cst_6 : f32 to vector<32x128xf32>
    %9 = arith.minimumf %5, %8 : vector<32x128xf32>
    %10 = math.exp %9 : vector<32x128xf32>
    %11 = math.log1p %10 : vector<32x128xf32>
    %12 = arith.select %7, %5, %11 : vector<32x128xi1>, vector<32x128xf32>
    %c0_7 = arith.constant 0 : index
    %c0_8 = arith.constant 0 : index
    %13 = vector.load %arg4[%c0_7, %c0_8] : memref<128x128xf32, #tpu.memory_space<vmem>>, vector<128x128xf32>
    %c0_9 = arith.constant 0 : index
    %c0_10 = arith.constant 0 : index
    %14 = vector.load %arg5[%c0_9, %c0_10] : memref<1x128xf32, #tpu.memory_space<vmem>>, vector<1x128xf32>
    %cst_11 = arith.constant dense<0.000000e+00> : vector<32x128xf32>
    %15 = tpu.matmul %12, %13, %cst_11 {dimension_numbers = #tpu.dot_dimension_numbers<[1], [0], [0], [1], [0, 0, 1, 1], [], []>} : vector<32x128xf32>, vector<128x128xf32>, vector<32x128xf32> -> vector<32x128xf32>
    %16 = vector.broadcast %14 : vector<1x128xf32> to vector<32x128xf32>
    %17 = arith.addf %15, %16 : vector<32x128xf32>
    %cst_12 = arith.constant 2.000000e+01 : f32
    %18 = vector.broadcast %cst_12 : f32 to vector<32x128xf32>
    %19 = arith.cmpf ogt, %17, %18 : vector<32x128xf32>
    %cst_13 = arith.constant 2.000000e+01 : f32
    %20 = vector.broadcast %cst_13 : f32 to vector<32x128xf32>
    %21 = arith.minimumf %17, %20 : vector<32x128xf32>
    %22 = math.exp %21 : vector<32x128xf32>
    %23 = math.log1p %22 : vector<32x128xf32>
    %24 = arith.select %19, %17, %23 : vector<32x128xi1>, vector<32x128xf32>
    %c0_14 = arith.constant 0 : index
    %c0_15 = arith.constant 0 : index
    %25 = vector.load %arg6[%c0_14, %c0_15] : memref<128x32xf32, #tpu.memory_space<vmem>>, vector<128x32xf32>
    %c0_16 = arith.constant 0 : index
    %c0_17 = arith.constant 0 : index
    %26 = vector.load %arg7[%c0_16, %c0_17] : memref<1x32xf32, #tpu.memory_space<vmem>>, vector<1x32xf32>
    %cst_18 = arith.constant dense<0.000000e+00> : vector<32x32xf32>
    %27 = tpu.matmul %24, %25, %cst_18 {dimension_numbers = #tpu.dot_dimension_numbers<[1], [0], [0], [1], [0, 0, 1, 1], [], []>} : vector<32x128xf32>, vector<128x32xf32>, vector<32x32xf32> -> vector<32x32xf32>
    %28 = vector.broadcast %26 : vector<1x32xf32> to vector<32x32xf32>
    %29 = arith.addf %27, %28 : vector<32x32xf32>
    %30 = tpu.iota {dimensions = array<i32: 1>} : vector<32x32xi32>
    %c16_i32 = arith.constant 16 : i32
    %31 = vector.broadcast %c16_i32 : i32 to vector<32x32xi32>
    %32 = arith.cmpi sge, %30, %31 : vector<32x32xi32>
    %33 = math.exp %29 : vector<32x32xf32>
    %34 = arith.select %32, %33, %29 : vector<32x32xi1>, vector<32x32xf32>
    %c0_19 = arith.constant 0 : index
    %c0_20 = arith.constant 0 : index
    %35 = vector.load %arg8[%c0_19, %c0_20] : memref<32x32xf32, #tpu.memory_space<vmem>>, vector<32x32xf32>
    tpu.vector_store %arg8[%c0_19, %c0_20], %34 {strides = array<i32>} : memref<32x32xf32, #tpu.memory_space<vmem>>, vector<32x32xf32>,
    return
  }
  func.func @transform_0(%arg0: i32) -> (i32, i32) {
    %c0_i32 = arith.constant 0 : i32
    %c0_i32_0 = arith.constant 0 : i32
    return %arg0, %c0_i32 : i32, i32
  }
  func.func @transform_1(%arg0: i32) -> (i32, i32) {
    %c0_i32 = arith.constant 0 : i32
    %c0_i32_0 = arith.constant 0 : i32
    %c0_i32_1 = arith.constant 0 : i32
    return %c0_i32, %c0_i32_0 : i32, i32
  }
  func.func @transform_2(%arg0: i32) -> (i32, i32) {
    %c0_i32 = arith.constant 0 : i32
    %c0_i32_0 = arith.constant 0 : i32
    %c0_i32_1 = arith.constant 0 : i32
    return %c0_i32, %c0_i32_0 : i32, i32
  }
  func.func @transform_3(%arg0: i32) -> (i32, i32) {
    %c0_i32 = arith.constant 0 : i32
    %c0_i32_0 = arith.constant 0 : i32
    %c0_i32_1 = arith.constant 0 : i32
    return %c0_i32, %c0_i32_0 : i32, i32
  }
  func.func @transform_4(%arg0: i32) -> (i32, i32) {
    %c0_i32 = arith.constant 0 : i32
    %c0_i32_0 = arith.constant 0 : i32
    %c0_i32_1 = arith.constant 0 : i32
    return %c0_i32, %c0_i32_0 : i32, i32
  }
  func.func @transform_5(%arg0: i32) -> (i32, i32) {
    %c0_i32 = arith.constant 0 : i32
    %c0_i32_0 = arith.constant 0 : i32
    %c0_i32_1 = arith.constant 0 : i32
    return %c0_i32, %c0_i32_0 : i32, i32
  }
  func.func @transform_6(%arg0: i32) -> (i32, i32) {
    %c0_i32 = arith.constant 0 : i32
    %c0_i32_0 = arith.constant 0 : i32
    %c0_i32_1 = arith.constant 0 : i32
    return %c0_i32, %c0_i32_0 : i32, i32
  }
  func.func @transform_7(%arg0: i32) -> (i32, i32) {
    %c0_i32 = arith.constant 0 : i32
    %c0_i32_0 = arith.constant 0 : i32
    return %arg0, %c0_i32 : i32, i32
  }
}

</mosaic_0001>

<llo_original>
// kernel: tpu_custom_call.1
$region0: #{tpu_custom_call.1}
  #allocation0 [shape = 'u32[]', space=smem, size = 0x4, offset = 0x4, fixed_abs, tag = 'smem constant byte address 0x4 - core index']
  #allocation1 [shape = 'u32[144,128]{1,0:T(1,128)}', space=vmem, size = 0x12000, scoped, tag = 'internal scratch']
  %s0 = inlined_call_operand.vmem [shape: f32[64,32], index: 0, kind: input, shape index: {}]
  %s1 = inlined_call_operand.vmem [shape: f32[32,128], index: 1, kind: input, shape index: {}]
  %s2 = inlined_call_operand.vmem [shape: f32[1,128], index: 2, kind: input, shape index: {}]
  %s3 = inlined_call_operand.vmem [shape: f32[128,128], index: 3, kind: input, shape index: {}]
  %s4 = inlined_call_operand.vmem [shape: f32[1,128], index: 4, kind: input, shape index: {}]
  %s5 = inlined_call_operand.vmem [shape: f32[128,32], index: 5, kind: input, shape index: {}]
  %s6 = inlined_call_operand.vmem [shape: f32[1,32], index: 6, kind: input, shape index: {}]
  %s7 = inlined_call_operand.vmem [shape: f32[64,32], index: 7, kind: output, shape index: {}]
  %s8 = sld [smem:[#allocation0]]
  $region61: #{tpu_custom_call.1} parent=0
    _
  %s10 = ssub.s32 1, %s8
  %s11 = scalar_select 0, %s10, %s8
  loop: start=0, step=1, limit=4
  $region2: #{tpu_custom_call.1} parent=0 // loop_pre_header
    _
  $region3: #{tpu_custom_call.1} parent=0 // loop_header
    %s13 = sphi 0, %s17
    %p14 = scmp.ge.s32.totalorder %s13, 4
    %s23 = sphi 0, %s25
    %s26 = sphi 0, %s23
    %s27 = sphi 0, %s26
    %s43 = sphi 0, %s27
    %s47 = sphi 0, %s47
    %s49 = sphi 0, %s47
    %s50 = sphi 0, %s49
    %s64 = sphi 0, %s50
    %s68 = sphi 0, %s68
    %s70 = sphi 0, %s68
    %s71 = sphi 0, %s70
    %s85 = sphi 0, %s71
    %s89 = sphi 0, %s89
    %s91 = sphi 0, %s89
    %s92 = sphi 0, %s91
    %s106 = sphi 0, %s92
    %s110 = sphi 0, %s110
    %s112 = sphi 0, %s110
    %s113 = sphi 0, %s112
    %s127 = sphi 0, %s113
    %s131 = sphi 0, %s131
    %s133 = sphi 0, %s131
    %s134 = sphi 0, %s133
    %s148 = sphi 0, %s134
    %s152 = sphi 0, %s152
    %s154 = sphi 0, %s152
    %s155 = sphi 0, %s154
    %s169 = sphi 0, %s155
    %s175 = sphi 0, %s177
    %s178 = sphi 0, %s175
    %s179 = sphi 0, %s178
    %s195 = sphi 0, %s179
  $region4: #{tpu_custom_call.1} parent=0 // loop_header_branch
    %16 = sbr.rel (%p14) target = $region8
  $region5: #{tpu_custom_call.1} parent=0 // loop_body
    %s18 = ssub.s32 %s13, 1
    %s19 = ssub.s32 %s13, 2
    %s20 = sadd.s32 %s13, 1
    %s21 = ssub.s32 %s13, %s20
    %p22 = scmp.eq.s32.totalorder %s21, 0
    %s24 = sadd.s32 %s23, 1
    %s25 = scalar_select %p22, %s23, %s24
    %p28 = pneg %p22
    %p29 = scmp.eq.s32.totalorder %s13, 1
    %p30 = por %p28, %p29
    %p31 = scmp.ne.s32.totalorder %s23, %s26
    %p32 = scmp.eq.s32.totalorder %s13, 0
    %p33 = por %p31, %p32
    %p34 = scmp.ne.s32.totalorder %s23, %s26
    %p35 = scmp.eq.s32.totalorder %s18, 1
    %p36 = por %p34, %p35
    %p37 = scmp.ne.s32.totalorder %s26, %s27
    %p38 = scmp.eq.s32.totalorder %s18, 0
    %p39 = por %p37, %p38
    %p40 = scmp.ne.s32.totalorder %s26, %s27
    %p41 = scmp.eq.s32.totalorder %s19, 1
    %p42 = por %p40, %p41
    %p44 = scmp.ne.s32.totalorder %s27, %s43
    %p45 = scmp.eq.s32.totalorder %s19, 0
    %p46 = por %p44, %p45
    %s48 = sadd.s32 %s47, 1
    %p51 = scmp.eq.s32.totalorder %s13, 1
    %p52 = scmp.ne.s32.totalorder %s47, %s49
    %p53 = scmp.eq.s32.totalorder %s13, 0
    %p54 = por %p52, %p53
    %p55 = scmp.ne.s32.totalorder %s47, %s49
    %p56 = scmp.eq.s32.totalorder %s18, 1
    %p57 = por %p55, %p56
    %p58 = scmp.ne.s32.totalorder %s49, %s50
    %p59 = scmp.eq.s32.totalorder %s18, 0
    %p60 = por %p58, %p59
    %p61 = scmp.ne.s32.totalorder %s49, %s50
    %p62 = scmp.eq.s32.totalorder %s19, 1
    %p63 = por %p61, %p62
    %p65 = scmp.ne.s32.totalorder %s50, %s64
    %p66 = scmp.eq.s32.totalorder %s19, 0
    %p67 = por %p65, %p66
    %s69 = sadd.s32 %s68, 1
    %p72 = scmp.eq.s32.totalorder %s13, 1
    %p73 = scmp.ne.s32.totalorder %s68, %s70
    %p74 = scmp.eq.s32.totalorder %s13, 0
    %p75 = por %p73, %p74
    %p76 = scmp.ne.s32.totalorder %s68, %s70
    %p77 = scmp.eq.s32.totalorder %s18, 1
    %p78 = por %p76, %p77
    %p79 = scmp.ne.s32.totalorder %s70, %s71
    %p80 = scmp.eq.s32.totalorder %s18, 0
    %p81 = por %p79, %p80
    %p82 = scmp.ne.s32.totalorder %s70, %s71
    %p83 = scmp.eq.s32.totalorder %s19, 1
    %p84 = por %p82, %p83
    %p86 = scmp.ne.s32.totalorder %s71, %s85
    %p87 = scmp.eq.s32.totalorder %s19, 0
    %p88 = por %p86, %p87
    %s90 = sadd.s32 %s89, 1
    %p93 = scmp.eq.s32.totalorder %s13, 1
    %p94 = scmp.ne.s32.totalorder %s89, %s91
    %p95 = scmp.eq.s32.totalorder %s13, 0
    %p96 = por %p94, %p95
    %p97 = scmp.ne.s32.totalorder %s89, %s91
    %p98 = scmp.eq.s32.totalorder %s18, 1
    %p99 = por %p97, %p98
    %p100 = scmp.ne.s32.totalorder %s91, %s92
    %p101 = scmp.eq.s32.totalorder %s18, 0
    %p102 = por %p100, %p101
    %p103 = scmp.ne.s32.totalorder %s91, %s92
    %p104 = scmp.eq.s32.totalorder %s19, 1
    %p105 = por %p103, %p104
    %p107 = scmp.ne.s32.totalorder %s92, %s106
    %p108 = scmp.eq.s32.totalorder %s19, 0
    %p109 = por %p107, %p108
    %s111 = sadd.s32 %s110, 1
    %p114 = scmp.eq.s32.totalorder %s13, 1
    %p115 = scmp.ne.s32.totalorder %s110, %s112
    %p116 = scmp.eq.s32.totalorder %s13, 0
    %p117 = por %p115, %p116
    %p118 = scmp.ne.s32.totalorder %s110, %s112
    %p119 = scmp.eq.s32.totalorder %s18, 1
    %p120 = por %p118, %p119
    %p121 = scmp.ne.s32.totalorder %s112, %s113
    %p122 = scmp.eq.s32.totalorder %s18, 0
    %p123 = por %p121, %p122
    %p124 = scmp.ne.s32.totalorder %s112, %s113
    %p125 = scmp.eq.s32.totalorder %s19, 1
    %p126 = por %p124, %p125
    %p128 = scmp.ne.s32.totalorder %s113, %s127
    %p129 = scmp.eq.s32.totalorder %s19, 0
    %p130 = por %p128, %p129
    %s132 = sadd.s32 %s131, 1
    %p135 = scmp.eq.s32.totalorder %s13, 1
    %p136 = scmp.ne.s32.totalorder %s131, %s133
    %p137 = scmp.eq.s32.totalorder %s13, 0
    %p138 = por %p136, %p137
    %p139 = scmp.ne.s32.totalorder %s131, %s133
    %p140 = scmp.eq.s32.totalorder %s18, 1
    %p141 = por %p139, %p140
    %p142 = scmp.ne.s32.totalorder %s133, %s134
    %p143 = scmp.eq.s32.totalorder %s18, 0
    %p144 = por %p142, %p143
    %p145 = scmp.ne.s32.totalorder %s133, %s134
    %p146 = scmp.eq.s32.totalorder %s19, 1
    %p147 = por %p145, %p146
    %p149 = scmp.ne.s32.totalorder %s134, %s148
    %p150 = scmp.eq.s32.totalorder %s19, 0
    %p151 = por %p149, %p150
    %s153 = sadd.s32 %s152, 1
    %p156 = scmp.eq.s32.totalorder %s13, 1
    %p157 = scmp.ne.s32.totalorder %s152, %s154
    %p158 = scmp.eq.s32.totalorder %s13, 0
    %p159 = por %p157, %p158
    %p160 = scmp.ne.s32.totalorder %s152, %s154
    %p161 = scmp.eq.s32.totalorder %s18, 1
    %p162 = por %p160, %p161
    %p163 = scmp.ne.s32.totalorder %s154, %s155
    %p164 = scmp.eq.s32.totalorder %s18, 0
    %p165 = por %p163, %p164
    %p166 = scmp.ne.s32.totalorder %s154, %s155
    %p167 = scmp.eq.s32.totalorder %s19, 1
    %p168 = por %p166, %p167
    %p170 = scmp.ne.s32.totalorder %s155, %s169
    %p171 = scmp.eq.s32.totalorder %s19, 0
    %p172 = por %p170, %p171
    %s173 = ssub.s32 %s13, %s20
    %p174 = scmp.eq.s32.totalorder %s173, 0
    %s176 = sadd.s32 %s175, 1
    %s177 = scalar_select %p174, %s175, %s176
    %p180 = pneg %p174
    %p181 = scmp.eq.s32.totalorder %s13, 1
    %p182 = por %p180, %p181
    %p183 = scmp.ne.s32.totalorder %s175, %s178
    %p184 = scmp.eq.s32.totalorder %s13, 0
    %p185 = por %p183, %p184
    %p186 = scmp.ne.s32.totalorder %s175, %s178
    %p187 = scmp.eq.s32.totalorder %s18, 1
    %p188 = por %p186, %p187
    %p189 = scmp.ne.s32.totalorder %s178, %s179
    %p190 = scmp.eq.s32.totalorder %s18, 0
    %p191 = por %p189, %p190
    %p192 = scmp.ne.s32.totalorder %s178, %s179
    %p193 = scmp.eq.s32.totalorder %s19, 1
    %p194 = por %p192, %p193
    %p196 = scmp.ne.s32.totalorder %s179, %s195
    %p197 = scmp.eq.s32.totalorder %s19, 0
    %p198 = por %p196, %p197
    %p199 = scmp.le.s32.totalorder 1, %s13
    %p200 = scmp.lt.s32.totalorder %s13, 3
    %p201 = pnand %p199, %p200
    %p202 = pneg %p201
    // Predicated region
    $region9: #{tpu_custom_call.1} parent=5 // pred_check
      _
    $region10: #{tpu_custom_call.1} parent=5 // pred_check_branch
      %204 = sbr.rel (%p201) target = $region12
    $region11: #{tpu_custom_call.1} parent=5 // pred_region
      %s205 = ssub.s32 %s13, 1
      // Predicated region
      $region13: #{tpu_custom_call.1} parent=11 // pred_check
        %p206 = pneg %p60
      $region14: #{tpu_custom_call.1} parent=11 // pred_check_branch
        %208 = sbr.rel (%p206) target = $region16
      $region15: #{tpu_custom_call.1} parent=11 // pred_region
        _
      $region16: #{tpu_custom_call.1} parent=11 // pred_fallthru
        _
      // Predicated region
      $region17: #{tpu_custom_call.1} parent=11 // pred_check
        %p209 = pneg %p81
      $region18: #{tpu_custom_call.1} parent=11 // pred_check_branch
        %211 = sbr.rel (%p209) target = $region20
      $region19: #{tpu_custom_call.1} parent=11 // pred_region
        _
      $region20: #{tpu_custom_call.1} parent=11 // pred_fallthru
        _
      // Predicated region
      $region21: #{tpu_custom_call.1} parent=11 // pred_check
        %p212 = pneg %p102
      $region22: #{tpu_custom_call.1} parent=11 // pred_check_branch
        %214 = sbr.rel (%p212) target = $region24
      $region23: #{tpu_custom_call.1} parent=11 // pred_region
        _
      $region24: #{tpu_custom_call.1} parent=11 // pred_fallthru
        _
      // Predicated region
      $region25: #{tpu_custom_call.1} parent=11 // pred_check
        %p215 = pneg %p123
      $region26: #{tpu_custom_call.1} parent=11 // pred_check_branch
        %217 = sbr.rel (%p215) target = $region28
      $region27: #{tpu_custom_call.1} parent=11 // pred_region
        _
      $region28: #{tpu_custom_call.1} parent=11 // pred_fallthru
        _
      // Predicated region
      $region29: #{tpu_custom_call.1} parent=11 // pred_check
        %p218 = pneg %p144
      $region30: #{tpu_custom_call.1} parent=11 // pred_check_branch
        %220 = sbr.rel (%p218) target = $region32
      $region31: #{tpu_custom_call.1} parent=11 // pred_region
        _
      $region32: #{tpu_custom_call.1} parent=11 // pred_fallthru
        _
      // Predicated region
      $region33: #{tpu_custom_call.1} parent=11 // pred_check
        %p221 = pneg %p165
      $region34: #{tpu_custom_call.1} parent=11 // pred_check_branch
        %223 = sbr.rel (%p221) target = $region36
      $region35: #{tpu_custom_call.1} parent=11 // pred_region
        _
      $region36: #{tpu_custom_call.1} parent=11 // pred_fallthru
        _
    $region12: #{tpu_custom_call.1} parent=5 // pred_fallthru
      _
    %p224 = scmp.lt.s32.totalorder %s13, 2
    // Predicated region
    $region37: #{tpu_custom_call.1} parent=5 // pred_check
      %p225 = pneg %p224
    $region38: #{tpu_custom_call.1} parent=5 // pred_check_branch
      %227 = sbr.rel (%p225) target = $region40
    $region39: #{tpu_custom_call.1} parent=5 // pred_region
      // Predicated region
      $region41: #{tpu_custom_call.1} parent=39 // pred_check
        %p228 = pneg %p33
      $region42: #{tpu_custom_call.1} parent=39 // pred_check_branch
        %230 = sbr.rel (%p228) target = $region44
      $region43: #{tpu_custom_call.1} parent=39 // pred_region
        %s231 = smul.u32 4, %s13
        %p232 = scmp.lt.s32.totalorder %s231, 7
        %s233 = scalar_select %p232, %s231, 7
        %s234 = smul.addr %s233, 8
        %s235 = scalar_lea.vmem %s0, %s234
        %s236 = smul.u32 4, %s13
      $region44: #{tpu_custom_call.1} parent=39 // pred_fallthru
        _
    $region40: #{tpu_custom_call.1} parent=5 // pred_fallthru
      _
    %p237 = scmp.le.s32.totalorder 1, %s13
    %p238 = scmp.lt.s32.totalorder %s13, 3
    %p239 = pnand %p237, %p238
    %p240 = pneg %p239
    // Predicated region
    $region45: #{tpu_custom_call.1} parent=5 // pred_check
      _
    $region46: #{tpu_custom_call.1} parent=5 // pred_check_branch
      %242 = sbr.rel (%p239) target = $region48
    $region47: #{tpu_custom_call.1} parent=5 // pred_region
      %s243 = ssub.s32 %s13, 1
      %s244 = smul.u32 4, %s18
      %p245 = scmp.lt.s32.totalorder %s244, 7
      %s246 = scalar_select %p245, %s244, 7
      %s247 = smul.addr %s246, 8
      %s248 = scalar_lea.vmem %s0, %s247
      %p249 = pneg %p39
      %p250 = pneg %p36
      %p251 = pneg %p60
      %p252 = pneg %p57
      %p253 = pneg %p81
      %p254 = pneg %p78
      %p255 = pneg %p102
      %p256 = pneg %p99
      %p257 = pneg %p123
      %p258 = pneg %p120
      %p259 = pneg %p144
      %p260 = pneg %p141
      %p261 = pneg %p165
      %p262 = pneg %p162
      %p263 = pneg %p191
      %p264 = pneg %p188
      %s265 = smul.u32 4, %s18
      %p266 = scmp.lt.s32.totalorder %s265, 7
      %s267 = scalar_select %p266, %s265, 7
      %s268 = smul.addr %s267, 8
      %s269 = scalar_lea.vmem %s7, %s268
      %s270 = smul.u32 4, %s18
      %p271 = scmp.lt.s32.totalorder %s270, 7
      %s272 = scalar_select %p271, %s270, 7
      %s273 = smul.addr %s272, 8
      %s274 = scalar_lea.vmem %s0, %s273
      %s275 = smul.u32 4, %s18
      %s276 = smul.u32 4, %s18
      %p277 = scmp.lt.s32.totalorder %s276, 7
      %s278 = scalar_select %p277, %s276, 7
      %s279 = smul.addr %s278, 8
      %s280 = scalar_lea.vmem %s7, %s279
      %s281 = smul.u32 4, %s18
      %v282 = vld [vmem:[%s274] sm:$0xff]
      %v283 = vld [vmem:[%s274 + $0x8] sm:$0xff]
      %v284 = vld [vmem:[%s274 + $0x10] sm:$0xff]
      %v285 = vld [vmem:[%s274 + $0x18] sm:$0xff]
      %v286 = vld [vmem:[%s1] sm:$0xff]
      %v287 = vld [vmem:[%s1 + $0x8] sm:$0xff]
      %v288 = vld [vmem:[%s1 + $0x10] sm:$0xff]
      %v289 = vld [vmem:[%s1 + $0x18] sm:$0xff]
      %v290 = vld [vmem:[%s2] sm:$0x1]
      %v292 = vlaneseq
      %v293 = vshrl.u32 %v292, 7
      %v294 = vsub.s32 0, %v293
      %v295 = vrot.slane %v290, %v294
      %vm297 = vcmask 261120
      %v299 = vsel %vm297, %v282, 0
      %v302 = vsel %vm297, %v283, 0
      %v305 = vsel %vm297, %v284, 0
      %v308 = vsel %vm297, %v285, 0
      %310 = vmatprep.subr.mxu0 0.0
      %311 = vmatpush1.msra.mxu0 0.0
      %312 = vmatprep.subr.mxu0 0.0
      %313 = vmatpush1.msra.mxu0 0.0
      %314 = vmatprep.subr.mxu0 0.0
      %315 = vmatpush1.msra.mxu0 0.0
      %316 = vmatprep.subr.mxu0 0.0
      %317 = vmatpush1.msra.mxu0 0.0
      %318 = vmatprep.subr.mxu0 0.0
      %319 = vmatpush1.msra.mxu0 0.0
      %320 = vmatprep.subr.mxu0 0.0
      %321 = vmatpush1.msra.mxu0 0.0
      %322 = vmatprep.subr.mxu0 0.0
      %323 = vmatpush1.msra.mxu0 0.0
      %324 = vmatprep.subr.mxu0 0.0
      %325 = vmatpush1.msra.mxu0 0.0
      %326 = vmatprep.subr.mxu0 0.0
      %327 = vmatpush1.msra.mxu0 0.0
      %328 = vmatprep.subr.mxu0 0.0
      %329 = vmatpush1.msra.mxu0 0.0
      %330 = vmatprep.subr.mxu0 0.0
      %331 = vmatpush1.msra.mxu0 0.0
      %332 = vmatprep.subr.mxu0 0.0
      %333 = vmatpush1.msra.mxu0 0.0
      %334 = vmatprep.subr.mxu0 0.0
      %335 = vmatpush1.msra.mxu0 %v289
      %336 = vmatprep.subr.mxu0 0.0
      %337 = vmatpush1.msra.mxu0 %v288
      %338 = vmatprep.subr.mxu0 0.0
      %339 = vmatpush1.msra.mxu0 %v287
      %340 = vmatprep.subr.mxu0 0.0
      %341 = vmatpush1.msra.mxu0 %v286
      %342 = vmatprep.subr.mxu0 0.0
      %343 = vmatpush2.msra.mxu0 0.0
      %344 = vmatprep.subr.mxu0 0.0
      %345 = vmatpush2.msra.mxu0 0.0
      %346 = vmatprep.subr.mxu0 0.0
      %347 = vmatpush2.msra.mxu0 0.0
      %348 = vmatprep.subr.mxu0 0.0
      %349 = vmatpush2.msra.mxu0 0.0
      %350 = vmatprep.subr.mxu0 0.0
      %351 = vmatpush2.msra.mxu0 0.0
      %352 = vmatprep.subr.mxu0 0.0
      %353 = vmatpush2.msra.mxu0 0.0
      %354 = vmatprep.subr.mxu0 0.0
      %355 = vmatpush2.msra.mxu0 0.0
      %356 = vmatprep.subr.mxu0 0.0
      %357 = vmatpush2.msra.mxu0 0.0
      %358 = vmatprep.subr.mxu0 0.0
      %359 = vmatpush2.msra.mxu0 0.0
      %360 = vmatprep.subr.mxu0 0.0
      %361 = vmatpush2.msra.mxu0 0.0
      %362 = vmatprep.subr.mxu0 0.0
      %363 = vmatpush2.msra.mxu0 0.0
      %364 = vmatprep.subr.mxu0 0.0
      %365 = vmatpush2.msra.mxu0 0.0
      %366 = vmatprep.subr.mxu0 0.0
      %367 = vmatpush2.msra.mxu0 0.0
      %368 = vmatprep.subr.mxu0 0.0
      %369 = vmatpush2.msra.mxu0 0.0
      %370 = vmatprep.subr.mxu0 0.0
      %371 = vmatpush2.msra.mxu0 0.0
      %372 = vmatprep.subr.mxu0 0.0
      %373 = vmatpush2.msra.mxu0 0.0
      %374 = vmatprep.mubr.f32.mxu0 0.0
      %375 = vmatmul.mubr.f32.gmra.mxu0 %v299
      %v376 = vpop.f32.mrf.mxu0
      %v377 = vadd.f32 %v295, %v376
      %v378 = vpop.f32.mrf.mxu0
      %379 = vmatprep.mubr.f32.mxu0 0.0
      %380 = vmatmul.mubr.f32.gmra.mxu0 %v302
      %v381 = vpop.f32.mrf.mxu0
      %v382 = vadd.f32 %v295, %v381
      %v383 = vpop.f32.mrf.mxu0
      %384 = vmatprep.mubr.f32.mxu0 0.0
      %385 = vmatmul.mubr.f32.gmra.mxu0 %v305
      %v386 = vpop.f32.mrf.mxu0
      %v387 = vadd.f32 %v295, %v386
      %v388 = vpop.f32.mrf.mxu0
      %389 = vmatprep.mubr.f32.mxu0 0.0
      %390 = vmatmul.mubr.f32.gmra.mxu0 %v308
      %v391 = vpop.f32.mrf.mxu0
      %v392 = vadd.f32 %v295, %v391
      %v393 = vpop.f32.mrf.mxu0
      %394 = vdwg.mxu0
      %vm395 = vcmp.gt.f32.partialorder %v377, 20.0
      %vm396 = vcmp.gt.f32.partialorder %v382, 20.0
      %vm397 = vcmp.gt.f32.partialorder %v387, 20.0
      %vm398 = vcmp.gt.f32.partialorder %v392, 20.0
      %v399 = vmin.f32 %v377, 20.0
      %v400 = vmin.f32 %v382, 20.0
      %v401 = vmin.f32 %v387, 20.0
      %v402 = vmin.f32 %v392, 20.0
      %v403 = vmul.f32 %v399, 1.442695
      %v404 = vpow.pop %v403
      %v405 = vmul.f32 %v400, 1.442695
      %v406 = vpow.pop %v405
      %v407 = vmul.f32 %v401, 1.442695
      %v408 = vpow.pop %v407
      %v409 = vmul.f32 %v402, 1.442695
      %v410 = vpow.pop %v409
      %v411 = vadd.f32 %v404, 1.0
      %v412 = vlog2.pop %v411
      %v413 = vmul.f32 %v412, 0.6931472
      %v414 = vmul.f32 -0.5, %v404
      %v415 = vadd.f32 %v414, 1.0
      %v416 = vmul.f32 %v415, %v404
      %v417 = vand.u32 2147483647, %v404
      %vm418 = vcmp.lt.f32.partialorder %v417, 0.0004427343
      %v419 = vsel %vm418, %v416, %v413
      %v420 = vadd.f32 %v406, 1.0
      %v421 = vlog2.pop %v420
      %v422 = vmul.f32 %v421, 0.6931472
      %v423 = vmul.f32 -0.5, %v406
      %v424 = vadd.f32 %v423, 1.0
      %v425 = vmul.f32 %v424, %v406
      %v426 = vand.u32 2147483647, %v406
      %vm427 = vcmp.lt.f32.partialorder %v426, 0.0004427343
      %v428 = vsel %vm427, %v425, %v422
      %v429 = vadd.f32 %v408, 1.0
      %v430 = vlog2.pop %v429
      %v431 = vmul.f32 %v430, 0.6931472
      %v432 = vmul.f32 -0.5, %v408
      %v433 = vadd.f32 %v432, 1.0
      %v434 = vmul.f32 %v433, %v408
      %v435 = vand.u32 2147483647, %v408
      %vm436 = vcmp.lt.f32.partialorder %v435, 0.0004427343
      %v437 = vsel %vm436, %v434, %v431
      %v438 = vadd.f32 %v410, 1.0
      %v439 = vlog2.pop %v438
      %v440 = vmul.f32 %v439, 0.6931472
      %v441 = vmul.f32 -0.5, %v410
      %v442 = vadd.f32 %v441, 1.0
      %v443 = vmul.f32 %v442, %v410
      %v444 = vand.u32 2147483647, %v410
      %vm445 = vcmp.lt.f32.partialorder %v444, 0.0004427343
      %v446 = vsel %vm445, %v443, %v440
      %v447 = vsel %vm395, %v377, %v419
      %v448 = vsel %vm396, %v382, %v428
      %v449 = vsel %vm397, %v387, %v437
      %v450 = vsel %vm398, %v392, %v446
      %v451 = vld [vmem:[%s3] sm:$0xff]
      %v452 = vld [vmem:[%s3 + $0x8] sm:$0xff]
      %v453 = vld [vmem:[%s3 + $0x10] sm:$0xff]
      %v454 = vld [vmem:[%s3 + $0x18] sm:$0xff]
      %v455 = vld [vmem:[%s3 + $0x20] sm:$0xff]
      %v456 = vld [vmem:[%s3 + $0x28] sm:$0xff]
      %v457 = vld [vmem:[%s3 + $0x30] sm:$0xff]
      %v458 = vld [vmem:[%s3 + $0x38] sm:$0xff]
      %v459 = vld [vmem:[%s3 + $0x40] sm:$0xff]
      %v460 = vld [vmem:[%s3 + $0x48] sm:$0xff]
      %v461 = vld [vmem:[%s3 + $0x50] sm:$0xff]
      %v462 = vld [vmem:[%s3 + $0x58] sm:$0xff]
      %v463 = vld [vmem:[%s3 + $0x60] sm:$0xff]
      %v464 = vld [vmem:[%s3 + $0x68] sm:$0xff]
      %v465 = vld [vmem:[%s3 + $0x70] sm:$0xff]
      %v466 = vld [vmem:[%s3 + $0x78] sm:$0xff]
      %v467 = vld [vmem:[%s4] sm:$0x1]
      %v469 = vlaneseq
      %v470 = vshrl.u32 %v469, 7
      %v471 = vsub.s32 0, %v470
      %v472 = vrot.slane %v467, %v471
      %474 = vmatprep.subr.mxu0 0.0
      %475 = vmatpush1.msra.mxu0 %v466
      %476 = vmatprep.subr.mxu0 0.0
      %477 = vmatpush1.msra.mxu0 %v465
      %478 = vmatprep.subr.mxu0 0.0
      %479 = vmatpush1.msra.mxu0 %v464
      %480 = vmatprep.subr.mxu0 0.0
      %481 = vmatpush1.msra.mxu0 %v463
      %482 = vmatprep.subr.mxu0 0.0
      %483 = vmatpush1.msra.mxu0 %v462
      %484 = vmatprep.subr.mxu0 0.0
      %485 = vmatpush1.msra.mxu0 %v461
      %486 = vmatprep.subr.mxu0 0.0
      %487 = vmatpush1.msra.mxu0 %v460
      %488 = vmatprep.subr.mxu0 0.0
      %489 = vmatpush1.msra.mxu0 %v459
      %490 = vmatprep.subr.mxu0 0.0
      %491 = vmatpush1.msra.mxu0 %v458
      %492 = vmatprep.subr.mxu0 0.0
      %493 = vmatpush1.msra.mxu0 %v457
      %494 = vmatprep.subr.mxu0 0.0
      %495 = vmatpush1.msra.mxu0 %v456
      %496 = vmatprep.subr.mxu0 0.0
      %497 = vmatpush1.msra.mxu0 %v455
      %498 = vmatprep.subr.mxu0 0.0
      %499 = vmatpush1.msra.mxu0 %v454
      %500 = vmatprep.subr.mxu0 0.0
      %501 = vmatpush1.msra.mxu0 %v453
      %502 = vmatprep.subr.mxu0 0.0
      %503 = vmatpush1.msra.mxu0 %v452
      %504 = vmatprep.subr.mxu0 0.0
      %505 = vmatpush1.msra.mxu0 %v451
      %506 = vmatprep.subr.mxu0 0.0
      %507 = vmatpush2.msra.mxu0 0.0
      %508 = vmatprep.subr.mxu0 0.0
      %509 = vmatpush2.msra.mxu0 0.0
      %510 = vmatprep.subr.mxu0 0.0
      %511 = vmatpush2.msra.mxu0 0.0
      %512 = vmatprep.subr.mxu0 0.0
      %513 = vmatpush2.msra.mxu0 0.0
      %514 = vmatprep.subr.mxu0 0.0
      %515 = vmatpush2.msra.mxu0 0.0
      %516 = vmatprep.subr.mxu0 0.0
      %517 = vmatpush2.msra.mxu0 0.0
      %518 = vmatprep.subr.mxu0 0.0
      %519 = vmatpush2.msra.mxu0 0.0
      %520 = vmatprep.subr.mxu0 0.0
      %521 = vmatpush2.msra.mxu0 0.0
      %522 = vmatprep.subr.mxu0 0.0
      %523 = vmatpush2.msra.mxu0 0.0
      %524 = vmatprep.subr.mxu0 0.0
      %525 = vmatpush2.msra.mxu0 0.0
      %526 = vmatprep.subr.mxu0 0.0
      %527 = vmatpush2.msra.mxu0 0.0
      %528 = vmatprep.subr.mxu0 0.0
      %529 = vmatpush2.msra.mxu0 0.0
      %530 = vmatprep.subr.mxu0 0.0
      %531 = vmatpush2.msra.mxu0 0.0
      %532 = vmatprep.subr.mxu0 0.0
      %533 = vmatpush2.msra.mxu0 0.0
      %534 = vmatprep.subr.mxu0 0.0
      %535 = vmatpush2.msra.mxu0 0.0
      %536 = vmatprep.subr.mxu0 0.0
      %537 = vmatpush2.msra.mxu0 0.0
      %538 = vmatprep.mubr.f32.mxu0 0.0
      %539 = vmatmul.mubr.f32.gmra.mxu0 %v447
      %v540 = vpop.f32.mrf.mxu0
      %v541 = vadd.f32 %v472, %v540
      %v542 = vpop.f32.mrf.mxu0
      %543 = vmatprep.mubr.f32.mxu0 0.0
      %544 = vmatmul.mubr.f32.gmra.mxu0 %v448
      %v545 = vpop.f32.mrf.mxu0
      %v546 = vadd.f32 %v472, %v545
      %v547 = vpop.f32.mrf.mxu0
      %548 = vmatprep.mubr.f32.mxu0 0.0
      %549 = vmatmul.mubr.f32.gmra.mxu0 %v449
      %v550 = vpop.f32.mrf.mxu0
      %v551 = vadd.f32 %v472, %v550
      %v552 = vpop.f32.mrf.mxu0
      %553 = vmatprep.mubr.f32.mxu0 0.0
      %554 = vmatmul.mubr.f32.gmra.mxu0 %v450
      %v555 = vpop.f32.mrf.mxu0
      %v556 = vadd.f32 %v472, %v555
      %v557 = vpop.f32.mrf.mxu0
      %558 = vdwg.mxu0
      %vm559 = vcmp.gt.f32.partialorder %v541, 20.0
      %vm560 = vcmp.gt.f32.partialorder %v546, 20.0
      %vm561 = vcmp.gt.f32.partialorder %v551, 20.0
      %vm562 = vcmp.gt.f32.partialorder %v556, 20.0
      %v563 = vmin.f32 %v541, 20.0
      %v564 = vmin.f32 %v546, 20.0
      %v565 = vmin.f32 %v551, 20.0
      %v566 = vmin.f32 %v556, 20.0
      %v567 = vmul.f32 %v563, 1.442695
      %v568 = vpow.pop %v567
      %v569 = vmul.f32 %v564, 1.442695
      %v570 = vpow.pop %v569
      %v571 = vmul.f32 %v565, 1.442695
      %v572 = vpow.pop %v571
      %v573 = vmul.f32 %v566, 1.442695
      %v574 = vpow.pop %v573
      %v575 = vadd.f32 %v568, 1.0
      %v576 = vlog2.pop %v575
      %v577 = vmul.f32 %v576, 0.6931472
      %v578 = vmul.f32 -0.5, %v568
      %v579 = vadd.f32 %v578, 1.0
      %v580 = vmul.f32 %v579, %v568
      %v581 = vand.u32 2147483647, %v568
      %vm582 = vcmp.lt.f32.partialorder %v581, 0.0004427343
      %v583 = vsel %vm582, %v580, %v577
      %v584 = vadd.f32 %v570, 1.0
      %v585 = vlog2.pop %v584
      %v586 = vmul.f32 %v585, 0.6931472
      %v587 = vmul.f32 -0.5, %v570
      %v588 = vadd.f32 %v587, 1.0
      %v589 = vmul.f32 %v588, %v570
      %v590 = vand.u32 2147483647, %v570
      %vm591 = vcmp.lt.f32.partialorder %v590, 0.0004427343
      %v592 = vsel %vm591, %v589, %v586
      %v593 = vadd.f32 %v572, 1.0
      %v594 = vlog2.pop %v593
      %v595 = vmul.f32 %v594, 0.6931472
      %v596 = vmul.f32 -0.5, %v572
      %v597 = vadd.f32 %v596, 1.0
      %v598 = vmul.f32 %v597, %v572
      %v599 = vand.u32 2147483647, %v572
      %vm600 = vcmp.lt.f32.partialorder %v599, 0.0004427343
      %v601 = vsel %vm600, %v598, %v595
      %v602 = vadd.f32 %v574, 1.0
      %v603 = vlog2.pop %v602
      %v604 = vmul.f32 %v603, 0.6931472
      %v605 = vmul.f32 -0.5, %v574
      %v606 = vadd.f32 %v605, 1.0
      %v607 = vmul.f32 %v606, %v574
      %v608 = vand.u32 2147483647, %v574
      %vm609 = vcmp.lt.f32.partialorder %v608, 0.0004427343
      %v610 = vsel %vm609, %v607, %v604
      %v611 = vsel %vm559, %v541, %v583
      %v612 = vsel %vm560, %v546, %v592
      %v613 = vsel %vm561, %v551, %v601
      %v614 = vsel %vm562, %v556, %v610
      %v615 = vld [vmem:[%s5] sm:$0xff]
      %v616 = vld [vmem:[%s5 + $0x8] sm:$0xff]
      %v617 = vld [vmem:[%s5 + $0x10] sm:$0xff]
      %v618 = vld [vmem:[%s5 + $0x18] sm:$0xff]
      %v619 = vld [vmem:[%s5 + $0x20] sm:$0xff]
      %v620 = vld [vmem:[%s5 + $0x28] sm:$0xff]
      %v621 = vld [vmem:[%s5 + $0x30] sm:$0xff]
      %v622 = vld [vmem:[%s5 + $0x38] sm:$0xff]
      %v623 = vld [vmem:[%s5 + $0x40] sm:$0xff]
      %v624 = vld [vmem:[%s5 + $0x48] sm:$0xff]
      %v625 = vld [vmem:[%s5 + $0x50] sm:$0xff]
      %v626 = vld [vmem:[%s5 + $0x58] sm:$0xff]
      %v627 = vld [vmem:[%s5 + $0x60] sm:$0xff]
      %v628 = vld [vmem:[%s5 + $0x68] sm:$0xff]
      %v629 = vld [vmem:[%s5 + $0x70] sm:$0xff]
      %v630 = vld [vmem:[%s5 + $0x78] sm:$0xff]
      %v631 = vld [vmem:[%s6] sm:$0x1]
      %v633 = vlaneseq
      %v634 = vshrl.u32 %v633, 7
      %v635 = vsub.s32 0, %v634
      %v636 = vrot.slane %v631, %v635
      %638 = vmatprep.subr.mxu0 0.0
      %639 = vmatpush1.msra.mxu0 %v630
      %640 = vmatprep.subr.mxu0 0.0
      %641 = vmatpush1.msra.mxu0 %v629
      %642 = vmatprep.subr.mxu0 0.0
      %643 = vmatpush1.msra.mxu0 %v628
      %644 = vmatprep.subr.mxu0 0.0
      %645 = vmatpush1.msra.mxu0 %v627
      %646 = vmatprep.subr.mxu0 0.0
      %647 = vmatpush1.msra.mxu0 %v626
      %648 = vmatprep.subr.mxu0 0.0
      %649 = vmatpush1.msra.mxu0 %v625
      %650 = vmatprep.subr.mxu0 0.0
      %651 = vmatpush1.msra.mxu0 %v624
      %652 = vmatprep.subr.mxu0 0.0
      %653 = vmatpush1.msra.mxu0 %v623
      %654 = vmatprep.subr.mxu0 0.0
      %655 = vmatpush1.msra.mxu0 %v622
      %656 = vmatprep.subr.mxu0 0.0
      %657 = vmatpush1.msra.mxu0 %v621
      %658 = vmatprep.subr.mxu0 0.0
      %659 = vmatpush1.msra.mxu0 %v620
      %660 = vmatprep.subr.mxu0 0.0
      %661 = vmatpush1.msra.mxu0 %v619
      %662 = vmatprep.subr.mxu0 0.0
      %663 = vmatpush1.msra.mxu0 %v618
      %664 = vmatprep.subr.mxu0 0.0
      %665 = vmatpush1.msra.mxu0 %v617
      %666 = vmatprep.subr.mxu0 0.0
      %667 = vmatpush1.msra.mxu0 %v616
      %668 = vmatprep.subr.mxu0 0.0
      %669 = vmatpush1.msra.mxu0 %v615
      %670 = vmatprep.subr.mxu0 0.0
      %671 = vmatpush2.msra.mxu0 0.0
      %672 = vmatprep.subr.mxu0 0.0
      %673 = vmatpush2.msra.mxu0 0.0
      %674 = vmatprep.subr.mxu0 0.0
      %675 = vmatpush2.msra.mxu0 0.0
      %676 = vmatprep.subr.mxu0 0.0
      %677 = vmatpush2.msra.mxu0 0.0
      %678 = vmatprep.subr.mxu0 0.0
      %679 = vmatpush2.msra.mxu0 0.0
      %680 = vmatprep.subr.mxu0 0.0
      %681 = vmatpush2.msra.mxu0 0.0
      %682 = vmatprep.subr.mxu0 0.0
      %683 = vmatpush2.msra.mxu0 0.0
      %684 = vmatprep.subr.mxu0 0.0
      %685 = vmatpush2.msra.mxu0 0.0
      %686 = vmatprep.subr.mxu0 0.0
      %687 = vmatpush2.msra.mxu0 0.0
      %688 = vmatprep.subr.mxu0 0.0
      %689 = vmatpush2.msra.mxu0 0.0
      %690 = vmatprep.subr.mxu0 0.0
      %691 = vmatpush2.msra.mxu0 0.0
      %692 = vmatprep.subr.mxu0 0.0
      %693 = vmatpush2.msra.mxu0 0.0
      %694 = vmatprep.subr.mxu0 0.0
      %695 = vmatpush2.msra.mxu0 0.0
      %696 = vmatprep.subr.mxu0 0.0
      %697 = vmatpush2.msra.mxu0 0.0
      %698 = vmatprep.subr.mxu0 0.0
      %699 = vmatpush2.msra.mxu0 0.0
      %700 = vmatprep.subr.mxu0 0.0
      %701 = vmatpush2.msra.mxu0 0.0
      %702 = vmatprep.mubr.f32.mxu0 0.0
      %703 = vmatmul.mubr.f32.gmra.mxu0 %v611
      %v704 = vpop.f32.mrf.mxu0
      %v705 = vadd.f32 %v636, %v704
      %v706 = vpop.f32.mrf.mxu0
      %707 = vmatprep.mubr.f32.mxu0 0.0
      %708 = vmatmul.mubr.f32.gmra.mxu0 %v612
      %v709 = vpop.f32.mrf.mxu0
      %v710 = vadd.f32 %v636, %v709
      %v711 = vpop.f32.mrf.mxu0
      %712 = vmatprep.mubr.f32.mxu0 0.0
      %713 = vmatmul.mubr.f32.gmra.mxu0 %v613
      %v714 = vpop.f32.mrf.mxu0
      %v715 = vadd.f32 %v636, %v714
      %v716 = vpop.f32.mrf.mxu0
      %717 = vmatprep.mubr.f32.mxu0 0.0
      %718 = vmatmul.mubr.f32.gmra.mxu0 %v614
      %v719 = vpop.f32.mrf.mxu0
      %v720 = vadd.f32 %v636, %v719
      %v721 = vpop.f32.mrf.mxu0
      %722 = vdwg.mxu0
      %v723 = vlaneseq
      %v724 = vand.u32 %v723, 127
      %vm725 = vcmp.ge.s32.totalorder %v724, 16
      %v726 = vmul.f32 %v705, 1.442695
      %v727 = vpow.pop %v726
      %v728 = vmul.f32 %v710, 1.442695
      %v729 = vpow.pop %v728
      %v730 = vmul.f32 %v715, 1.442695
      %v731 = vpow.pop %v730
      %v732 = vmul.f32 %v720, 1.442695
      %v733 = vpow.pop %v732
      %v734 = vsel %vm725, %v727, %v705
      %v735 = vsel %vm725, %v729, %v710
      %v736 = vsel %vm725, %v731, %v715
      %v737 = vsel %vm725, %v733, %v720
      %738 = vst.msk [vmem:[%s280] sm:$0xff] %vm297, %v734
      %739 = vst.msk [vmem:[%s280 + $0x8] sm:$0xff] %vm297, %v735
      %740 = vst.msk [vmem:[%s280 + $0x10] sm:$0xff] %vm297, %v736
      %741 = vst.msk [vmem:[%s280 + $0x18] sm:$0xff] %vm297, %v737
      %s742 = smul.u32 4, %s18
      %p743 = scmp.lt.s32.totalorder %s742, 7
      %s744 = scalar_select %p743, %s742, 7
      %s745 = smul.addr %s744, 8
      %s746 = scalar_lea.vmem %s7, %s745
      // Predicated region
      $region49: #{tpu_custom_call.1} parent=47 // pred_check
        %p747 = pneg %p188
      $region50: #{tpu_custom_call.1} parent=47 // pred_check_branch
        %749 = sbr.rel (%p747) target = $region52
      $region51: #{tpu_custom_call.1} parent=47 // pred_region
        %s750 = smul.u32 4, %s18
      $region52: #{tpu_custom_call.1} parent=47 // pred_fallthru
        _
    $region48: #{tpu_custom_call.1} parent=5 // pred_fallthru
      _
    %p751 = scmp.le.s32.totalorder 2, %s13
    // Predicated region
    $region53: #{tpu_custom_call.1} parent=5 // pred_check
      %p752 = pneg %p751
    $region54: #{tpu_custom_call.1} parent=5 // pred_check_branch
      %754 = sbr.rel (%p752) target = $region56
    $region55: #{tpu_custom_call.1} parent=5 // pred_region
      %s755 = ssub.s32 %s13, 2
      // Predicated region
      $region57: #{tpu_custom_call.1} parent=55 // pred_check
        %p756 = pneg %p194
      $region58: #{tpu_custom_call.1} parent=55 // pred_check_branch
        %758 = sbr.rel (%p756) target = $region60
      $region59: #{tpu_custom_call.1} parent=55 // pred_region
        %s759 = smul.u32 4, %s19
        %p760 = scmp.lt.s32.totalorder %s759, 7
        %s761 = scalar_select %p760, %s759, 7
        %s762 = smul.addr %s761, 8
        %s763 = scalar_lea.vmem %s7, %s762
      $region60: #{tpu_custom_call.1} parent=55 // pred_fallthru
        _
    $region56: #{tpu_custom_call.1} parent=5 // pred_fallthru
      _
  $region6: #{tpu_custom_call.1} parent=0 // loop_footer
    %s17 = sadd.s32 1, %s13
  $region7: #{tpu_custom_call.1} parent=0 // loop_footer_branch
    %12 = sbr.rel target = $region3
  $region8: #{tpu_custom_call.1} parent=0 // loop_exit
    _

</llo_original>
